<compile_context>
chip_gen: v6e
topology: v6e:2x2x1
jax: 0.10.0
libtpu: 0.0.40
codegen_flags: <defaults>
</compile_context>

<pallas_src>
import functools

import jax
import jax.numpy as jnp
import numpy as np
from jax import lax
from jax.experimental import pallas as pl
from jax.experimental.pallas import tpu as pltpu

_LANES = 128


def _wce_dice_kernel(pred_ref, tgt_ref, out_ref, *, ts, lb_inner, lb_total,
                     l_valid, tail_masked, has_skipped):
    """Per-block partial-sum kernel.

    pred_ref : VMEM (2, TS, 128)  f32/bf16 logits block (class, sublane-row, lane)
    tgt_ref  : VMEM (TS, 128)     i32      targets in {0, 1}
    out_ref  : VMEM (5, 8, 128)   f32      per-(batch,split) partials, resident across the
               inner (L-block) grid axis:
                 [0] sum p1*t1  [1] sum p1  [2] sum t1  [3] sum nll*t1  [4] sum nll
    """
    li = pl.program_id(2)

    @pl.when(li == 0)
    def _init():
        out_ref[...] = jnp.zeros_like(out_ref)

    # Global row-block index within this batch row (split s owns blocks
    # [s*lb_inner, (s+1)*lb_inner)).
    gbi = pl.program_id(1) * lb_inner + li

    def fold(q):
        # (TS, 128) -> (8, 128): groups of 8 sublane rows; pure vreg adds, no XLU.
        return jnp.sum(q.reshape(ts // 8, 8, _LANES), axis=0)

    def accumulate(masked):
        x0 = pred_ref[0].astype(jnp.float32)            # (TS, 128)
        x1 = pred_ref[1].astype(jnp.float32)

        # 2-class softmax closed form, numerically stable:
        #   d = x1 - x0, softplus(-d) = -log p1, p1 = exp(-softplus(-d)) = sigmoid(d)
        # (exp/log/exp all go to the EUP slot; no VALU divide, compare or select.)
        d = x1 - x0
        e = jnp.exp(-jnp.abs(d))
        sp = jnp.maximum(-d, 0.0) + jnp.log(1.0 + e)    # softplus(-d)
        p1 = jnp.exp(-sp)

        t1b = tgt_ref[...] != 0                         # targets assumed in {0, 1}
        t1 = t1b.astype(jnp.float32)
        nll = sp + jnp.where(t1b, 0.0, d)               # -log softmax[target]
        p1t1 = jnp.where(t1b, p1, 0.0)
        nll1 = jnp.where(t1b, nll, 0.0)

        if masked:
            # Tail block only: positions >= L are either zero padding (ragged L) or
            # unspecified data from a partial tile - mask with selects so arbitrary bit
            # patterns (NaN/Inf) cannot propagate into the sums.
            rows = lax.broadcasted_iota(jnp.int32, (ts, _LANES), 0)
            cols = lax.broadcasted_iota(jnp.int32, (ts, _LANES), 1)
            pos = gbi * (ts * _LANES) + rows * _LANES + cols
            valid = pos < l_valid
            zero = jnp.zeros_like(d)
            p1 = jnp.where(valid, p1, zero)
            t1 = jnp.where(valid, t1, zero)
            p1t1 = jnp.where(valid, p1t1, zero)
            nll = jnp.where(valid, nll, zero)
            nll1 = jnp.where(valid, nll1, zero)

        out_ref[0, :, :] += fold(p1t1)
        out_ref[1, :, :] += fold(p1)
        out_ref[2, :, :] += fold(t1)
        out_ref[3, :, :] += fold(nll1)
        out_ref[4, :, :] += fold(nll)

    if tail_masked:
        @pl.when(gbi < lb_total - 1)
        def _full_blocks():
            accumulate(False)

        @pl.when(gbi == lb_total - 1)
        def _tail_block():
            accumulate(True)
    elif has_skipped:
        @pl.when(gbi < lb_total)
        def _guarded():
            accumulate(False)
    else:
        accumulate(False)


def wce_dice_loss(pred, target, weight_ce, *, smooth=1e-4, beta=1.0,
                  block_sublanes=2048, core_splits=2):
    """pred: (N, 2, L) float logits (f32 or bf16); target: (N, L) ints in {0,1};
    weight_ce: (2,) class weights.  Returns the scalar WCE + beta * weighted-dice loss."""
    n, c, l = pred.shape
    assert c == 2, "kernel is specialized for 2 classes"
    assert target.shape == (n, l)

    if target.dtype != jnp.int32:
        target = target.astype(jnp.int32)

    lrows = -(-l // _LANES)                             # ceil(L / 128) sublane rows
    if l % _LANES != 0:
        # Ragged L: pad only to the next (8, 128) tile (< 1024 elements), never to a
        # full block multiple.  Padded positions are masked in-kernel.
        # TODO(synk): fuse this pad with the op producing `pred` to avoid the extra pass.
        lrows = -(-lrows // 8) * 8
        lpad = lrows * _LANES
        pred = jnp.pad(pred, ((0, 0), (0, 0), (0, lpad - l)))
        target = jnp.pad(target, ((0, 0), (0, lpad - l)))

    pred4 = pred.reshape(n, 2, lrows, _LANES)           # contiguous split of L -> free
    tgt3 = target.reshape(n, lrows, _LANES)

    ts = max(8, min(block_sublanes, lrows))
    ts = -(-ts // 8) * 8                                # sublane multiple for f32/i32 tiles
    lb_total = -(-lrows // ts)                          # row-blocks per batch row
    tail_masked = lb_total * ts * _LANES != l           # last block has padded/OOB positions

    # Explicit split of the L-block range so megacore (v7x) gets >=2 parallel units even
    # for N=1; each (batch, split) pair owns its own partial-output block.
    splits = max(1, min(core_splits, lb_total))
    lb_inner = -(-lb_total // splits)
    has_skipped = splits * lb_inner > lb_total          # a few duplicate blocks are skipped

    if has_skipped:
        def rb(s, li):                                  # clamp so no block index goes OOB
            return jnp.minimum(s * lb_inner + li, lb_total - 1)
    else:
        def rb(s, li):
            return s * lb_inner + li

    kernel = functools.partial(
        _wce_dice_kernel, ts=ts, lb_inner=lb_inner, lb_total=lb_total,
        l_valid=l, tail_masked=tail_masked, has_skipped=has_skipped)

    pred_block = 2 * ts * _LANES * pred.dtype.itemsize
    tgt_block = ts * _LANES * tgt3.dtype.itemsize
    est = 2 * (pred_block + tgt_block) + 16 * ts * _LANES * 4 + (1 << 20)
    vmem_limit = max(32 << 20, min(est, 64 << 20))

    parts = pl.pallas_call(
        kernel,
        out_shape=jax.ShapeDtypeStruct((n * splits, 5, 8, _LANES), jnp.float32),
        grid=(n, splits, lb_inner),
        in_specs=[
            pl.BlockSpec((None, 2, ts, _LANES), lambda i, s, li: (i, 0, rb(s, li), 0)),
            pl.BlockSpec((None, ts, _LANES), lambda i, s, li: (i, rb(s, li), 0)),
        ],
        out_specs=pl.BlockSpec((None, 5, 8, _LANES),
                               lambda i, s, li: (i * splits + s, 0, 0, 0)),
        compiler_params=pltpu.CompilerParams(
            dimension_semantics=("parallel", "parallel", "arbitrary"),
            vmem_limit_bytes=vmem_limit,
        ),
    )(pred4, tgt3)

    # Tiny finalize in plain JAX: merge the per-(batch,split) partials, apply the CE class
    # weights, and derive all class-0 sums from the static valid element count.
    sums = jnp.sum(parts, axis=(0, 2, 3))               # (5,)
    inter1, psum1, tsum1, nll1, nll_all = sums[0], sums[1], sums[2], sums[3], sums[4]
    count = jnp.float32(n * l)
    psum0 = count - psum1                               # sum p0
    tsum0 = count - tsum1                               # sum t0
    inter0 = count - psum1 - tsum1 + inter1             # sum p0*t0
    w = weight_ce.astype(jnp.float32)
    w0, w1 = w[0], w[1]
    dice = (w0 * (1.0 - 2.0 * inter0 / (psum0 + tsum0 + smooth)) +
            w1 * (1.0 - 2.0 * inter1 / (psum1 + tsum1 + smooth)))
    nll0 = nll_all - nll1
    wce = (w0 * nll0 + w1 * nll1) / (w0 * tsum0 + w1 * tsum1)   # weighted-mean CE reduction
    return wce + beta * dice


def _reference(pred, target, weight_ce, smooth=1e-4, beta=1.0):
    """Pure-JAX reproduction of the PyTorch forward pass."""
    p = jax.nn.softmax(pred, axis=1)                       # (N, 2, L)
    t_oh = jax.nn.one_hot(target, 2, dtype=jnp.float32)    # (N, L, 2)
    t_oh = jnp.transpose(t_oh, (0, 2, 1))                  # (N, 2, L)

    dice = 0.0
    for cls in range(2):
        iflat = p[:, cls].reshape(-1)
        tflat = t_oh[:, cls].reshape(-1)
        inter = jnp.sum(iflat * tflat)
        dice += weight_ce[cls] * (
            1.0 - 2.0 * inter / (jnp.sum(iflat) + jnp.sum(tflat) + smooth))

    logp = jax.nn.log_softmax(pred, axis=1)                # (N, 2, L)
    nll = -jnp.take_along_axis(logp, target[:, None, :], axis=1)[:, 0, :]  # (N, L)
    w_elem = weight_ce[target]                             # (N, L)
    wce = jnp.sum(w_elem * nll) / jnp.sum(w_elem)
    return wce + beta * dice


if __name__ == "__main__":
    key = jax.random.PRNGKey(0)
    weight_ce = jnp.array([0.3, 0.7], dtype=jnp.float32)   # deterministic class weights

    cases = [
        # (N, L, pred dtype, block_sublanes, core_splits)
        (2, 2048, jnp.float32, 2048, 2),   # single full block: no mask, no pad
        (1, 8192, jnp.float32, 16, 2),     # multi-block accumulation + 2-way L split at N=1
        (2, 5120, jnp.float32, 24, 2),     # partial (unpadded) tail block, tail-only mask
        (1, 6144, jnp.float32, 16, 2),     # odd block count -> clamped / skipped block path
        (2, 300, jnp.float32, 2048, 2),    # ragged L: minimal 128-lane pad + tail mask
        (2, 4096, jnp.bfloat16, 2048, 2),  # bf16 logits accepted directly (no host cast)
    ]
    for idx, (n, l, dt, bs, cs) in enumerate(cases):
        kp = jax.random.fold_in(key, 2 * idx)
        kt = jax.random.fold_in(key, 2 * idx + 1)
        pred = jax.random.normal(kp, (n, 2, l), dtype=jnp.float32)
        target = jax.random.randint(kt, (n, l), 0, 2, dtype=jnp.int32)
        pred_in = pred.astype(dt)

        loss_fn = jax.jit(functools.partial(wce_dice_loss,
                                            block_sublanes=bs, core_splits=cs))
        loss = jax.block_until_ready(loss_fn(pred_in, target, weight_ce))

        ref = _reference(pred_in.astype(jnp.float32), target, weight_ce,
                         smooth=1e-4, beta=1.0)
        np.testing.assert_allclose(np.asarray(loss), np.asarray(ref),
                                   rtol=1e-4, atol=1e-5)

    print("KERNEL_OK")
</pallas_src>

<mosaic_0001>
module attributes {stable_mosaic.version = 11 : i64} {
  func.func @_wce_dice_kernel(%arg0: i32, %arg1: i32, %arg2: i32, %arg3: memref<1x2x16x128xf32, #tpu.memory_space<vmem>>, %arg4: memref<1x16x128xi32, #tpu.memory_space<vmem>>, %arg5: memref<1x5x8x128xf32, #tpu.memory_space<vmem>>) attributes {dimension_semantics = [#tpu.dimension_semantics<parallel>, #tpu.dimension_semantics<parallel>, #tpu.dimension_semantics<arbitrary>], iteration_bounds = array<i64: 2, 1, 1>, scalar_prefetch = 0 : i64, scratch_operands = 0 : i64, tpu.core_type = #tpu.core_type<tc>, window_params = [{transform_indices = @transform_0, window_bounds = array<i64: 1, 2, 16, 128>}, {transform_indices = @transform_1, window_bounds = array<i64: 1, 16, 128>}, {transform_indices = @transform_2, window_bounds = array<i64: 1, 5, 8, 128>}]} {
    %c0_i32 = arith.constant 0 : i32
    %0 = arith.cmpi eq, %arg2, %c0_i32 : i32
    %1 = arith.extui %0 : i1 to i32
    %c0_i32_0 = arith.constant 0 : i32
    %2 = arith.cmpi ne, %1, %c0_i32_0 : i32
    scf.if %2 {
      %cst_60 = arith.constant 0.000000e+00 : f32
      %76 = vector.broadcast %cst_60 : f32 to vector<5x8x128xf32>
      %c0_61 = arith.constant 0 : index
      %c0_62 = arith.constant 0 : index
      %c0_63 = arith.constant 0 : index
      %c0_64 = arith.constant 0 : index
      %77 = vector.load %arg5[%c0_61, %c0_62, %c0_63, %c0_64] : memref<1x5x8x128xf32, #tpu.memory_space<vmem>>, vector<1x5x8x128xf32>
      %78 = vector.shape_cast %77 : vector<1x5x8x128xf32> to vector<5x8x128xf32>
      %79 = vector.shape_cast %76 : vector<5x8x128xf32> to vector<1x5x8x128xf32>
      tpu.vector_store %arg5[%c0_61, %c0_62, %c0_63, %c0_64], %79 {strides = array<i32>} : memref<1x5x8x128xf32, #tpu.memory_space<vmem>>, vector<1x5x8x128xf32>,
    } else {
    }
    %c0 = arith.constant 0 : index
    %c0_1 = arith.constant 0 : index
    %c0_2 = arith.constant 0 : index
    %c0_3 = arith.constant 0 : index
    %3 = vector.load %arg3[%c0, %c0_1, %c0_2, %c0_3] : memref<1x2x16x128xf32, #tpu.memory_space<vmem>>, vector<1x1x16x128xf32>
    %4 = vector.shape_cast %3 : vector<1x1x16x128xf32> to vector<16x128xf32>
    %c0_4 = arith.constant 0 : index
    %c1 = arith.constant 1 : index
    %c0_5 = arith.constant 0 : index
    %c0_6 = arith.constant 0 : index
    %5 = vector.load %arg3[%c0_4, %c1, %c0_5, %c0_6] : memref<1x2x16x128xf32, #tpu.memory_space<vmem>>, vector<1x1x16x128xf32>
    %6 = vector.shape_cast %5 : vector<1x1x16x128xf32> to vector<16x128xf32>
    %7 = arith.subf %6, %4 : vector<16x128xf32>
    %8 = math.absf %7 : vector<16x128xf32>
    %cst = arith.constant 0.000000e+00 : f32
    %9 = vector.broadcast %cst : f32 to vector<16x128xf32>
    %10 = arith.subf %9, %8 : vector<16x128xf32>
    %11 = math.exp %10 : vector<16x128xf32>
    %cst_7 = arith.constant 0.000000e+00 : f32
    %12 = vector.broadcast %cst_7 : f32 to vector<16x128xf32>
    %13 = arith.subf %12, %7 : vector<16x128xf32>
    %cst_8 = arith.constant 0.000000e+00 : f32
    %14 = vector.broadcast %cst_8 : f32 to vector<16x128xf32>
    %15 = arith.maximumf %13, %14 : vector<16x128xf32>
    %cst_9 = arith.constant 1.000000e+00 : f32
    %16 = vector.broadcast %cst_9 : f32 to vector<16x128xf32>
    %17 = arith.addf %16, %11 : vector<16x128xf32>
    %18 = math.log %17 : vector<16x128xf32>
    %19 = arith.addf %15, %18 : vector<16x128xf32>
    %cst_10 = arith.constant 0.000000e+00 : f32
    %20 = vector.broadcast %cst_10 : f32 to vector<16x128xf32>
    %21 = arith.subf %20, %19 : vector<16x128xf32>
    %22 = math.exp %21 : vector<16x128xf32>
    %c0_11 = arith.constant 0 : index
    %c0_12 = arith.constant 0 : index
    %c0_13 = arith.constant 0 : index
    %23 = vector.load %arg4[%c0_11, %c0_12, %c0_13] : memref<1x16x128xi32, #tpu.memory_space<vmem>>, vector<1x16x128xi32>
    %24 = vector.shape_cast %23 : vector<1x16x128xi32> to vector<16x128xi32>
    %c0_i32_14 = arith.constant 0 : i32
    %25 = vector.broadcast %c0_i32_14 : i32 to vector<16x128xi32>
    %26 = arith.cmpi ne, %24, %25 : vector<16x128xi32>
    %27 = arith.extui %26 : vector<16x128xi1> to vector<16x128xi32>
    %28 = arith.sitofp %27 : vector<16x128xi32> to vector<16x128xf32>
    %cst_15 = arith.constant 0.000000e+00 : f32
    %29 = vector.broadcast %cst_15 : f32 to vector<16x128xf32>
    %30 = arith.select %26, %29, %7 : vector<16x128xi1>, vector<16x128xf32>
    %31 = arith.addf %19, %30 : vector<16x128xf32>
    %cst_16 = arith.constant 0.000000e+00 : f32
    %32 = vector.broadcast %cst_16 : f32 to vector<16x128xf32>
    %33 = arith.select %26, %22, %32 : vector<16x128xi1>, vector<16x128xf32>
    %cst_17 = arith.constant 0.000000e+00 : f32
    %34 = vector.broadcast %cst_17 : f32 to vector<16x128xf32>
    %35 = arith.select %26, %31, %34 : vector<16x128xi1>, vector<16x128xf32>
    %c0_18 = arith.constant 0 : index
    %c0_19 = arith.constant 0 : index
    %c0_20 = arith.constant 0 : index
    %c0_21 = arith.constant 0 : index
    %36 = vector.load %arg5[%c0_18, %c0_19, %c0_20, %c0_21] : memref<1x5x8x128xf32, #tpu.memory_space<vmem>>, vector<1x1x8x128xf32>
    %37 = vector.shape_cast %36 : vector<1x1x8x128xf32> to vector<8x128xf32>
    %38 = vector.shape_cast %33 : vector<16x128xf32> to vector<2x8x128xf32>
    %cst_22 = arith.constant dense<0.000000e+00> : vector<8x128xf32>
    %39 = vector.multi_reduction <add>, %38, %cst_22 [0] : vector<2x8x128xf32> to vector<8x128xf32>
    %40 = arith.addf %37, %39 : vector<8x128xf32>
    %c0_23 = arith.constant 0 : index
    %c0_24 = arith.constant 0 : index
    %c0_25 = arith.constant 0 : index
    %c0_26 = arith.constant 0 : index
    %41 = vector.load %arg5[%c0_23, %c0_24, %c0_25, %c0_26] : memref<1x5x8x128xf32, #tpu.memory_space<vmem>>, vector<1x1x8x128xf32>
    %42 = vector.shape_cast %41 : vector<1x1x8x128xf32> to vector<8x128xf32>
    %43 = vector.shape_cast %40 : vector<8x128xf32> to vector<1x1x8x128xf32>
    tpu.vector_store %arg5[%c0_23, %c0_24, %c0_25, %c0_26], %43 {strides = array<i32>} : memref<1x5x8x128xf32, #tpu.memory_space<vmem>>, vector<1x1x8x128xf32>,
    %c0_27 = arith.constant 0 : index
    %c1_28 = arith.constant 1 : index
    %c0_29 = arith.constant 0 : index
    %c0_30 = arith.constant 0 : index
    %44 = vector.load %arg5[%c0_27, %c1_28, %c0_29, %c0_30] : memref<1x5x8x128xf32, #tpu.memory_space<vmem>>, vector<1x1x8x128xf32>
    %45 = vector.shape_cast %44 : vector<1x1x8x128xf32> to vector<8x128xf32>
    %46 = vector.shape_cast %22 : vector<16x128xf32> to vector<2x8x128xf32>
    %cst_31 = arith.constant dense<0.000000e+00> : vector<8x128xf32>
    %47 = vector.multi_reduction <add>, %46, %cst_31 [0] : vector<2x8x128xf32> to vector<8x128xf32>
    %48 = arith.addf %45, %47 : vector<8x128xf32>
    %c0_32 = arith.constant 0 : index
    %c1_33 = arith.constant 1 : index
    %c0_34 = arith.constant 0 : index
    %c0_35 = arith.constant 0 : index
    %49 = vector.load %arg5[%c0_32, %c1_33, %c0_34, %c0_35] : memref<1x5x8x128xf32, #tpu.memory_space<vmem>>, vector<1x1x8x128xf32>
    %50 = vector.shape_cast %49 : vector<1x1x8x128xf32> to vector<8x128xf32>
    %51 = vector.shape_cast %48 : vector<8x128xf32> to vector<1x1x8x128xf32>
    tpu.vector_store %arg5[%c0_32, %c1_33, %c0_34, %c0_35], %51 {strides = array<i32>} : memref<1x5x8x128xf32, #tpu.memory_space<vmem>>, vector<1x1x8x128xf32>,
    %c0_36 = arith.constant 0 : index
    %c2 = arith.constant 2 : index
    %c0_37 = arith.constant 0 : index
    %c0_38 = arith.constant 0 : index
    %52 = vector.load %arg5[%c0_36, %c2, %c0_37, %c0_38] : memref<1x5x8x128xf32, #tpu.memory_space<vmem>>, vector<1x1x8x128xf32>
    %53 = vector.shape_cast %52 : vector<1x1x8x128xf32> to vector<8x128xf32>
    %54 = vector.shape_cast %28 : vector<16x128xf32> to vector<2x8x128xf32>
    %cst_39 = arith.constant dense<0.000000e+00> : vector<8x128xf32>
    %55 = vector.multi_reduction <add>, %54, %cst_39 [0] : vector<2x8x128xf32> to vector<8x128xf32>
    %56 = arith.addf %53, %55 : vector<8x128xf32>
    %c0_40 = arith.constant 0 : index
    %c2_41 = arith.constant 2 : index
    %c0_42 = arith.constant 0 : index
    %c0_43 = arith.constant 0 : index
    %57 = vector.load %arg5[%c0_40, %c2_41, %c0_42, %c0_43] : memref<1x5x8x128xf32, #tpu.memory_space<vmem>>, vector<1x1x8x128xf32>
    %58 = vector.shape_cast %57 : vector<1x1x8x128xf32> to vector<8x128xf32>
    %59 = vector.shape_cast %56 : vector<8x128xf32> to vector<1x1x8x128xf32>
    tpu.vector_store %arg5[%c0_40, %c2_41, %c0_42, %c0_43], %59 {strides = array<i32>} : memref<1x5x8x128xf32, #tpu.memory_space<vmem>>, vector<1x1x8x128xf32>,
    %c0_44 = arith.constant 0 : index
    %c3 = arith.constant 3 : index
    %c0_45 = arith.constant 0 : index
    %c0_46 = arith.constant 0 : index
    %60 = vector.load %arg5[%c0_44, %c3, %c0_45, %c0_46] : memref<1x5x8x128xf32, #tpu.memory_space<vmem>>, vector<1x1x8x128xf32>
    %61 = vector.shape_cast %60 : vector<1x1x8x128xf32> to vector<8x128xf32>
    %62 = vector.shape_cast %35 : vector<16x128xf32> to vector<2x8x128xf32>
    %cst_47 = arith.constant dense<0.000000e+00> : vector<8x128xf32>
    %63 = vector.multi_reduction <add>, %62, %cst_47 [0] : vector<2x8x128xf32> to vector<8x128xf32>
    %64 = arith.addf %61, %63 : vector<8x128xf32>
    %c0_48 = arith.constant 0 : index
    %c3_49 = arith.constant 3 : index
    %c0_50 = arith.constant 0 : index
    %c0_51 = arith.constant 0 : index
    %65 = vector.load %arg5[%c0_48, %c3_49, %c0_50, %c0_51] : memref<1x5x8x128xf32, #tpu.memory_space<vmem>>, vector<1x1x8x128xf32>
    %66 = vector.shape_cast %65 : vector<1x1x8x128xf32> to vector<8x128xf32>
    %67 = vector.shape_cast %64 : vector<8x128xf32> to vector<1x1x8x128xf32>
    tpu.vector_store %arg5[%c0_48, %c3_49, %c0_50, %c0_51], %67 {strides = array<i32>} : memref<1x5x8x128xf32, #tpu.memory_space<vmem>>, vector<1x1x8x128xf32>,
    %c0_52 = arith.constant 0 : index
    %c4 = arith.constant 4 : index
    %c0_53 = arith.constant 0 : index
    %c0_54 = arith.constant 0 : index
    %68 = vector.load %arg5[%c0_52, %c4, %c0_53, %c0_54] : memref<1x5x8x128xf32, #tpu.memory_space<vmem>>, vector<1x1x8x128xf32>
    %69 = vector.shape_cast %68 : vector<1x1x8x128xf32> to vector<8x128xf32>
    %70 = vector.shape_cast %31 : vector<16x128xf32> to vector<2x8x128xf32>
    %cst_55 = arith.constant dense<0.000000e+00> : vector<8x128xf32>
    %71 = vector.multi_reduction <add>, %70, %cst_55 [0] : vector<2x8x128xf32> to vector<8x128xf32>
    %72 = arith.addf %69, %71 : vector<8x128xf32>
    %c0_56 = arith.constant 0 : index
    %c4_57 = arith.constant 4 : index
    %c0_58 = arith.constant 0 : index
    %c0_59 = arith.constant 0 : index
    %73 = vector.load %arg5[%c0_56, %c4_57, %c0_58, %c0_59] : memref<1x5x8x128xf32, #tpu.memory_space<vmem>>, vector<1x1x8x128xf32>
    %74 = vector.shape_cast %73 : vector<1x1x8x128xf32> to vector<8x128xf32>
    %75 = vector.shape_cast %72 : vector<8x128xf32> to vector<1x1x8x128xf32>
    tpu.vector_store %arg5[%c0_56, %c4_57, %c0_58, %c0_59], %75 {strides = array<i32>} : memref<1x5x8x128xf32, #tpu.memory_space<vmem>>, vector<1x1x8x128xf32>,
    return
  }
  func.func @transform_0(%arg0: i32, %arg1: i32, %arg2: i32) -> (i32, i32, i32, i32) {
    %c1_i32 = arith.constant 1 : i32
    %0 = arith.muli %arg1, %c1_i32 : i32
    %1 = arith.addi %0, %arg2 : i32
    %c0_i32 = arith.constant 0 : i32
    %c0_i32_0 = arith.constant 0 : i32
    %c0_i32_1 = arith.constant 0 : i32
    return %arg0, %c0_i32, %1, %c0_i32_0 : i32, i32, i32, i32
  }
  func.func @transform_1(%arg0: i32, %arg1: i32, %arg2: i32) -> (i32, i32, i32) {
    %c1_i32 = arith.constant 1 : i32
    %0 = arith.muli %arg1, %c1_i32 : i32
    %1 = arith.addi %0, %arg2 : i32
    %c0_i32 = arith.constant 0 : i32
    %c0_i32_0 = arith.constant 0 : i32
    return %arg0, %1, %c0_i32 : i32, i32, i32
  }
  func.func @transform_2(%arg0: i32, %arg1: i32, %arg2: i32) -> (i32, i32, i32, i32) {
    %c1_i32 = arith.constant 1 : i32
    %0 = arith.muli %arg0, %c1_i32 : i32
    %1 = arith.addi %0, %arg1 : i32
    %c0_i32 = arith.constant 0 : i32
    %c0_i32_0 = arith.constant 0 : i32
    %c0_i32_1 = arith.constant 0 : i32
    %c0_i32_2 = arith.constant 0 : i32
    return %1, %c0_i32, %c0_i32_0, %c0_i32_1 : i32, i32, i32, i32
  }
}

</mosaic_0001>

<llo_original>
// kernel: wce_dice_loss.1
$region0: #{wce_dice_loss.1}
  #allocation0 [shape = 'u32[]', space=smem, size = 0x4, offset = 0x4, fixed_abs, tag = 'smem constant byte address 0x4 - core index']
  #allocation1 [shape = 'u32[144,128]{1,0:T(1,128)}', space=vmem, size = 0x12000, scoped, tag = 'internal scratch']
  %s0 = inlined_call_operand.vmem [shape: f32[2,2,16,128], index: 0, kind: input, shape index: {}]
  %s1 = inlined_call_operand.vmem [shape: s32[2,16,128], index: 1, kind: input, shape index: {}]
  %s2 = inlined_call_operand.vmem [shape: f32[2,5,8,128], index: 2, kind: output, shape index: {}]
  %s3 = sld [smem:[#allocation0]]
  $region45: #{wce_dice_loss.1} parent=0
    _
  %s5 = ssub.s32 1, %s3
  %s6 = scalar_select 0, %s5, %s3
  loop: start=0, step=1, limit=4
  $region2: #{wce_dice_loss.1} parent=0 // loop_pre_header
    _
  $region3: #{wce_dice_loss.1} parent=0 // loop_header
    %s8 = sphi 0, %s12
    %p9 = scmp.ge.s32.totalorder %s8, 4
    %s15 = sphi 0, %s34
    %s16 = sphi 0, %s30
    %s17 = sphi 0, %s26
    %s18 = sphi 0, %s15
    %s19 = sphi 0, %s16
    %s20 = sphi 0, %s17
    %s21 = sphi 0, %s18
    %s22 = sphi 0, %s19
    %s23 = sphi 0, %s20
    %s41 = sphi 0, %s43
    %s44 = sphi 0, %s41
    %s45 = sphi 0, %s44
    %s61 = sphi 0, %s45
    %s71 = sphi 0, %s73
    %s74 = sphi 0, %s71
    %s75 = sphi 0, %s74
    %s91 = sphi 0, %s75
    %s99 = sphi 0, %s101
    %s102 = sphi 0, %s99
    %s103 = sphi 0, %s102
    %s119 = sphi 0, %s103
  $region4: #{wce_dice_loss.1} parent=0 // loop_header_branch
    %11 = sbr.rel (%p9) target = $region8
  $region5: #{wce_dice_loss.1} parent=0 // loop_body
    %s13 = ssub.s32 %s8, 1
    %s14 = ssub.s32 %s8, 2
    %s24 = sadd.s32 1, %s17
    %p25 = scmp.ge.s32.totalorder %s24, 1
    %s26 = scalar_select %p25, 0, %s24
    %s27 = sadd.s32 1, %s16
    %s28 = scalar_select %p25, %s27, %s16
    %p29 = scmp.ge.s32.totalorder %s28, 1
    %s30 = scalar_select %p29, 0, %s28
    %s31 = sadd.s32 1, %s15
    %s32 = scalar_select %p29, %s31, %s15
    %p33 = scmp.ge.s32.totalorder %s32, 2
    %s34 = scalar_select %p33, 0, %s32
    %s35 = sadd.s32 %s16, %s17
    %s36 = sadd.s32 %s30, %s26
    %s37 = ssub.s32 %s15, %s34
    %s38 = ssub.s32 %s35, %s36
    %s39 = sor.u32 %s37, %s38
    %p40 = scmp.eq.s32.totalorder %s39, 0
    %s42 = sadd.s32 %s41, 1
    %s43 = scalar_select %p40, %s41, %s42
    %p46 = pneg %p40
    %p47 = scmp.eq.s32.totalorder %s8, 1
    %p48 = por %p46, %p47
    %p49 = scmp.ne.s32.totalorder %s41, %s44
    %p50 = scmp.eq.s32.totalorder %s8, 0
    %p51 = por %p49, %p50
    %p52 = scmp.ne.s32.totalorder %s41, %s44
    %p53 = scmp.eq.s32.totalorder %s13, 1
    %p54 = por %p52, %p53
    %p55 = scmp.ne.s32.totalorder %s44, %s45
    %p56 = scmp.eq.s32.totalorder %s13, 0
    %p57 = por %p55, %p56
    %p58 = scmp.ne.s32.totalorder %s44, %s45
    %p59 = scmp.eq.s32.totalorder %s14, 1
    %p60 = por %p58, %p59
    %p62 = scmp.ne.s32.totalorder %s45, %s61
    %p63 = scmp.eq.s32.totalorder %s14, 0
    %p64 = por %p62, %p63
    %s65 = sadd.s32 %s16, %s17
    %s66 = sadd.s32 %s30, %s26
    %s67 = ssub.s32 %s15, %s34
    %s68 = ssub.s32 %s65, %s66
    %s69 = sor.u32 %s67, %s68
    %p70 = scmp.eq.s32.totalorder %s69, 0
    %s72 = sadd.s32 %s71, 1
    %s73 = scalar_select %p70, %s71, %s72
    %p76 = pneg %p70
    %p77 = scmp.eq.s32.totalorder %s8, 1
    %p78 = por %p76, %p77
    %p79 = scmp.ne.s32.totalorder %s71, %s74
    %p80 = scmp.eq.s32.totalorder %s8, 0
    %p81 = por %p79, %p80
    %p82 = scmp.ne.s32.totalorder %s71, %s74
    %p83 = scmp.eq.s32.totalorder %s13, 1
    %p84 = por %p82, %p83
    %p85 = scmp.ne.s32.totalorder %s74, %s75
    %p86 = scmp.eq.s32.totalorder %s13, 0
    %p87 = por %p85, %p86
    %p88 = scmp.ne.s32.totalorder %s74, %s75
    %p89 = scmp.eq.s32.totalorder %s14, 1
    %p90 = por %p88, %p89
    %p92 = scmp.ne.s32.totalorder %s75, %s91
    %p93 = scmp.eq.s32.totalorder %s14, 0
    %p94 = por %p92, %p93
    %s95 = sadd.s32 %s15, %s16
    %s96 = sadd.s32 %s34, %s30
    %s97 = ssub.s32 %s95, %s96
    %p98 = scmp.eq.s32.totalorder %s97, 0
    %s100 = sadd.s32 %s99, 1
    %s101 = scalar_select %p98, %s99, %s100
    %p104 = pneg %p98
    %p105 = scmp.eq.s32.totalorder %s8, 1
    %p106 = por %p104, %p105
    %p107 = scmp.ne.s32.totalorder %s99, %s102
    %p108 = scmp.eq.s32.totalorder %s8, 0
    %p109 = por %p107, %p108
    %p110 = scmp.ne.s32.totalorder %s99, %s102
    %p111 = scmp.eq.s32.totalorder %s13, 1
    %p112 = por %p110, %p111
    %p113 = scmp.ne.s32.totalorder %s102, %s103
    %p114 = scmp.eq.s32.totalorder %s13, 0
    %p115 = por %p113, %p114
    %p116 = scmp.ne.s32.totalorder %s102, %s103
    %p117 = scmp.eq.s32.totalorder %s14, 1
    %p118 = por %p116, %p117
    %p120 = scmp.ne.s32.totalorder %s103, %s119
    %p121 = scmp.eq.s32.totalorder %s14, 0
    %p122 = por %p120, %p121
    %p123 = scmp.le.s32.totalorder 1, %s8
    %p124 = scmp.lt.s32.totalorder %s8, 3
    %p125 = pnand %p123, %p124
    %p126 = pneg %p125
    // Predicated region
    $region9: #{wce_dice_loss.1} parent=5 // pred_check
      _
    $region10: #{wce_dice_loss.1} parent=5 // pred_check_branch
      %128 = sbr.rel (%p125) target = $region12
    $region11: #{wce_dice_loss.1} parent=5 // pred_region
      %s129 = ssub.s32 %s8, 1
    $region12: #{wce_dice_loss.1} parent=5 // pred_fallthru
      _
    %p130 = scmp.lt.s32.totalorder %s8, 2
    // Predicated region
    $region13: #{wce_dice_loss.1} parent=5 // pred_check
      %p131 = pneg %p130
    $region14: #{wce_dice_loss.1} parent=5 // pred_check_branch
      %133 = sbr.rel (%p131) target = $region16
    $region15: #{wce_dice_loss.1} parent=5 // pred_region
      // Predicated region
      $region17: #{wce_dice_loss.1} parent=15 // pred_check
        %p134 = pneg %p51
      $region18: #{wce_dice_loss.1} parent=15 // pred_check_branch
        %136 = sbr.rel (%p134) target = $region20
      $region19: #{wce_dice_loss.1} parent=15 // pred_region
        %s137 = sadd.s32 %s16, %s17
        %s138 = smul.u32 2, %s137
        %p139 = scmp.lt.s32.totalorder %s15, 1
        %s140 = scalar_select %p139, %s15, 1
        %p141 = scmp.lt.s32.totalorder %s138, 1
        %s142 = scalar_select %p141, %s138, 1
        %s143 = smul.addr %s140, 4
        %s144 = sadd.s32 %s142, %s143
        %s145 = smul.addr %s144, 8
        %s146 = scalar_lea.vmem %s0, %s145
        %s147 = sadd.s32 %s16, %s17
        %s148 = smul.u32 2, %s147
      $region20: #{wce_dice_loss.1} parent=15 // pred_fallthru
        _
      // Predicated region
      $region21: #{wce_dice_loss.1} parent=15 // pred_check
        %p149 = pneg %p81
      $region22: #{wce_dice_loss.1} parent=15 // pred_check_branch
        %151 = sbr.rel (%p149) target = $region24
      $region23: #{wce_dice_loss.1} parent=15 // pred_region
        %s152 = sadd.s32 %s16, %s17
        %s153 = smul.u32 2, %s152
        %p154 = scmp.lt.s32.totalorder %s15, 1
        %s155 = scalar_select %p154, %s15, 1
        %p156 = scmp.lt.s32.totalorder %s153, 1
        %s157 = scalar_select %p156, %s153, 1
        %s158 = smul.addr %s155, 2
        %s159 = sadd.s32 %s157, %s158
        %s160 = smul.addr %s159, 8
        %s161 = scalar_lea.vmem %s1, %s160
        %s162 = sadd.s32 %s16, %s17
        %s163 = smul.u32 2, %s162
      $region24: #{wce_dice_loss.1} parent=15 // pred_fallthru
        _
    $region16: #{wce_dice_loss.1} parent=5 // pred_fallthru
      _
    %p164 = scmp.le.s32.totalorder 1, %s8
    %p165 = scmp.lt.s32.totalorder %s8, 3
    %p166 = pnand %p164, %p165
    %p167 = pneg %p166
    // Predicated region
    $region25: #{wce_dice_loss.1} parent=5 // pred_check
      _
    $region26: #{wce_dice_loss.1} parent=5 // pred_check_branch
      %169 = sbr.rel (%p166) target = $region28
    $region27: #{wce_dice_loss.1} parent=5 // pred_region
      %s170 = ssub.s32 %s8, 1
      %s171 = sadd.s32 %s19, %s20
      %s172 = smul.u32 2, %s171
      %p173 = scmp.lt.s32.totalorder %s18, 1
      %s174 = scalar_select %p173, %s18, 1
      %p175 = scmp.lt.s32.totalorder %s172, 1
      %s176 = scalar_select %p175, %s172, 1
      %s177 = smul.addr %s174, 4
      %s178 = sadd.s32 %s176, %s177
      %s179 = smul.addr %s178, 8
      %s180 = scalar_lea.vmem %s0, %s179
      %p181 = pneg %p57
      %p182 = pneg %p54
      %s183 = sadd.s32 %s19, %s20
      %s184 = smul.u32 2, %s183
      %p185 = scmp.lt.s32.totalorder %s18, 1
      %s186 = scalar_select %p185, %s18, 1
      %p187 = scmp.lt.s32.totalorder %s184, 1
      %s188 = scalar_select %p187, %s184, 1
      %s189 = smul.addr %s186, 2
      %s190 = sadd.s32 %s188, %s189
      %s191 = smul.addr %s190, 8
      %s192 = scalar_lea.vmem %s1, %s191
      %p193 = pneg %p87
      %p194 = pneg %p84
      %p195 = pneg %p115
      %p196 = pneg %p112
      %s197 = sadd.s32 %s18, %s19
      %p198 = scmp.lt.s32.totalorder %s197, 1
      %s199 = scalar_select %p198, %s197, 1
      %s200 = smul.addr %s199, 5
      %s201 = smul.addr %s200, 8
      %s202 = scalar_lea.vmem %s2, %s201
      %s203 = sadd.s32 %s19, %s20
      %s204 = smul.u32 2, %s203
      %p205 = scmp.lt.s32.totalorder %s18, 1
      %s206 = scalar_select %p205, %s18, 1
      %p207 = scmp.lt.s32.totalorder %s204, 1
      %s208 = scalar_select %p207, %s204, 1
      %s209 = smul.addr %s206, 4
      %s210 = sadd.s32 %s208, %s209
      %s211 = smul.addr %s210, 8
      %s212 = scalar_lea.vmem %s0, %s211
      %s213 = sadd.s32 %s19, %s20
      %s214 = smul.u32 2, %s213
      %s215 = sadd.s32 %s19, %s20
      %s216 = smul.u32 2, %s215
      %p217 = scmp.lt.s32.totalorder %s18, 1
      %s218 = scalar_select %p217, %s18, 1
      %p219 = scmp.lt.s32.totalorder %s216, 1
      %s220 = scalar_select %p219, %s216, 1
      %s221 = smul.addr %s218, 2
      %s222 = sadd.s32 %s220, %s221
      %s223 = smul.addr %s222, 8
      %s224 = scalar_lea.vmem %s1, %s223
      %s225 = sadd.s32 %s19, %s20
      %s226 = smul.u32 2, %s225
      %s227 = sadd.s32 %s18, %s19
      %p228 = scmp.lt.s32.totalorder %s227, 1
      %s229 = scalar_select %p228, %s227, 1
      %s230 = smul.addr %s229, 5
      %s231 = smul.addr %s230, 8
      %s232 = scalar_lea.vmem %s2, %s231
      %s233 = sadd.s32 %s18, %s19
      %p234 = scmp.eq.s32.totalorder %s20, 0
      // Predicated region
      $region29: #{wce_dice_loss.1} parent=27 // pred_check
        %p235 = pneg %p234
      $region30: #{wce_dice_loss.1} parent=27 // pred_check_branch
        %237 = sbr.rel (%p235) target = $region32
      $region31: #{wce_dice_loss.1} parent=27 // pred_region
        %238 = vst [vmem:[%s232] sm:$0xff] 0.0
        %239 = vst [vmem:[%s232 + $0x8] sm:$0xff] 0.0
        %240 = vst [vmem:[%s232 + $0x10] sm:$0xff] 0.0
        %241 = vst [vmem:[%s232 + $0x18] sm:$0xff] 0.0
        %242 = vst [vmem:[%s232 + $0x20] sm:$0xff] 0.0
      $region32: #{wce_dice_loss.1} parent=27 // pred_fallthru
        _
      %v243 = vld [vmem:[%s212] sm:$0xff]
      %v244 = vld [vmem:[%s212 + $0x8] sm:$0xff]
      %s245 = scalar_lea.vmem %s212, 16
      %v246 = vld [vmem:[%s245] sm:$0xff]
      %v247 = vld [vmem:[%s245 + $0x8] sm:$0xff]
      %v248 = vsub.f32 %v246, %v243
      %v249 = vsub.f32 %v247, %v244
      %v250 = vand.u32 2147483647, %v248
      %v251 = vand.u32 2147483647, %v249
      %v252 = vsub.f32 0.0, %v250
      %v253 = vsub.f32 0.0, %v251
      %v254 = vmul.f32 %v252, 1.442695
      %v255 = vpow.pop %v254
      %v256 = vmul.f32 %v253, 1.442695
      %v257 = vpow.pop %v256
      %v258 = vsub.f32 0.0, %v248
      %v259 = vsub.f32 0.0, %v249
      %v260 = vmax.f32 %v258, 0.0
      %v261 = vmax.f32 %v259, 0.0
      %v262 = vadd.f32 %v255, 1.0
      %v263 = vadd.f32 %v257, 1.0
      %v264 = vlog2.pop %v262
      %v265 = vmul.f32 %v264, 0.6931472
      %v266 = vlog2.pop %v263
      %v267 = vmul.f32 %v266, 0.6931472
      %v268 = vadd.f32 %v260, %v265
      %v269 = vadd.f32 %v261, %v267
      %v270 = vsub.f32 0.0, %v268
      %v271 = vsub.f32 0.0, %v269
      %v272 = vmul.f32 %v270, 1.442695
      %v273 = vpow.pop %v272
      %v274 = vmul.f32 %v271, 1.442695
      %v275 = vpow.pop %v274
      %v276 = vld [vmem:[%s224] sm:$0xff]
      %v277 = vld [vmem:[%s224 + $0x8] sm:$0xff]
      %vm278 = vcmp.ne.s32.totalorder %v276, 0
      %vm279 = vcmp.ne.s32.totalorder %v277, 0
      %v280 = vsel %vm278, 1, 0
      %v281 = vsel %vm279, 1, 0
      %v282 = vcvt.s32.f32 %v280
      %v283 = vcvt.s32.f32 %v281
      %v284 = vsel %vm278, 0.0, %v248
      %v285 = vsel %vm279, 0.0, %v249
      %v286 = vadd.f32 %v268, %v284
      %v287 = vadd.f32 %v269, %v285
      %v288 = vsel %vm278, %v273, 0.0
      %v289 = vsel %vm279, %v275, 0.0
      %v290 = vsel %vm278, %v286, 0.0
      %v291 = vsel %vm279, %v287, 0.0
      %v292 = vld [vmem:[%s232] sm:$0xff]
      %v293 = vadd.f32 %v288, %v289
      %v294 = vadd.f32 %v292, %v293
      %295 = vst [vmem:[%s232] sm:$0xff] %v294
      %s296 = scalar_lea.vmem %s232, 8
      %v297 = vld [vmem:[%s296] sm:$0xff]
      %v298 = vadd.f32 %v273, %v275
      %v299 = vadd.f32 %v297, %v298
      %300 = vst [vmem:[%s296] sm:$0xff] %v299
      %s301 = scalar_lea.vmem %s232, 16
      %v302 = vld [vmem:[%s301] sm:$0xff]
      %v303 = vadd.f32 %v282, %v283
      %v304 = vadd.f32 %v302, %v303
      %305 = vst [vmem:[%s301] sm:$0xff] %v304
      %s306 = scalar_lea.vmem %s232, 24
      %v307 = vld [vmem:[%s306] sm:$0xff]
      %v308 = vadd.f32 %v290, %v291
      %v309 = vadd.f32 %v307, %v308
      %310 = vst [vmem:[%s306] sm:$0xff] %v309
      %s311 = scalar_lea.vmem %s232, 32
      %v312 = vld [vmem:[%s311] sm:$0xff]
      %v313 = vadd.f32 %v286, %v287
      %v314 = vadd.f32 %v312, %v313
      %315 = vst [vmem:[%s311] sm:$0xff] %v314
      %s316 = sadd.s32 %s18, %s19
      %p317 = scmp.lt.s32.totalorder %s316, 1
      %s318 = scalar_select %p317, %s316, 1
      %s319 = smul.addr %s318, 5
      %s320 = smul.addr %s319, 8
      %s321 = scalar_lea.vmem %s2, %s320
      // Predicated region
      $region33: #{wce_dice_loss.1} parent=27 // pred_check
        %p322 = pneg %p112
      $region34: #{wce_dice_loss.1} parent=27 // pred_check_branch
        %324 = sbr.rel (%p322) target = $region36
      $region35: #{wce_dice_loss.1} parent=27 // pred_region
        %s325 = sadd.s32 %s18, %s19
      $region36: #{wce_dice_loss.1} parent=27 // pred_fallthru
        _
    $region28: #{wce_dice_loss.1} parent=5 // pred_fallthru
      _
    %p326 = scmp.le.s32.totalorder 2, %s8
    // Predicated region
    $region37: #{wce_dice_loss.1} parent=5 // pred_check
      %p327 = pneg %p326
    $region38: #{wce_dice_loss.1} parent=5 // pred_check_branch
      %329 = sbr.rel (%p327) target = $region40
    $region39: #{wce_dice_loss.1} parent=5 // pred_region
      %s330 = ssub.s32 %s8, 2
      // Predicated region
      $region41: #{wce_dice_loss.1} parent=39 // pred_check
        %p331 = pneg %p118
      $region42: #{wce_dice_loss.1} parent=39 // pred_check_branch
        %333 = sbr.rel (%p331) target = $region44
      $region43: #{wce_dice_loss.1} parent=39 // pred_region
        %s334 = sadd.s32 %s21, %s22
        %p335 = scmp.lt.s32.totalorder %s334, 1
        %s336 = scalar_select %p335, %s334, 1
        %s337 = smul.addr %s336, 5
        %s338 = smul.addr %s337, 8
        %s339 = scalar_lea.vmem %s2, %s338
      $region44: #{wce_dice_loss.1} parent=39 // pred_fallthru
        _
    $region40: #{wce_dice_loss.1} parent=5 // pred_fallthru
      _
  $region6: #{wce_dice_loss.1} parent=0 // loop_footer
    %s12 = sadd.s32 1, %s8
  $region7: #{wce_dice_loss.1} parent=0 // loop_footer_branch
    %7 = sbr.rel target = $region3
  $region8: #{wce_dice_loss.1} parent=0 // loop_exit
    _

</llo_original>
